<compile_context>
chip_gen: v6e
topology: v6e:2x2x1
jax: 0.10.0
libtpu: 0.0.40
codegen_flags: <defaults>
</compile_context>

<pallas_src>
import functools

import jax
import jax.numpy as jnp
from jax.experimental import pallas as pl
from jax.experimental.pallas import tpu as pltpu


def _mh_loss_kernel(*refs, num_heads, has_weight, temp, div_scale, ce_scale):
    head_refs = refs[:num_heads]
    tgt_ref = refs[num_heads]
    if has_weight:
        wt_ref = refs[num_heads + 1]
        out_ref = refs[num_heads + 2]
    else:
        wt_ref = None
        out_ref = refs[num_heads + 1]

    @pl.when(pl.program_id(1) == 0)
    def _():
        out_ref[...] = jnp.zeros_like(out_ref)

    tb, c = head_refs[0].shape
    use_div = div_scale != 0.0                 # static (matches diversity_weight != 0)
    need_logit_sum = use_div or (not has_weight)
    use_mxu_rowsum = c >= 512                  # static: offload row sums to idle MXU
    inv_temp = 1.0 / temp

    if use_mxu_rowsum:
        ones_rhs = jnp.ones((c, 128), jnp.float32)   # hoisted constant

        def row_sum(v):                        # (tb, c) f32 -> (tb, 1) via MXU
            return jnp.dot(v, ones_rhs, preferred_element_type=jnp.float32)[:, :1]
    else:
        def row_sum(v):                        # XLU lane reduction
            return jnp.sum(v, axis=1, keepdims=True)

    # Target mask (tb, c): lane index == target class (no (B, C) one-hot input).
    # TODO(synk): out-of-range targets silently yield tgt_logit = 0 (PyTorch raises);
    #             add a pl.debug_check in interpret mode if strictness is needed.
    tgt = tgt_ref[...]                                            # (tb, 1) int32
    class_ids = jax.lax.broadcasted_iota(jnp.int32, (tb, c), 1)   # (tb, c)
    tgt_mask = class_ids == tgt

    if has_weight:
        wt = wt_ref[...].astype(jnp.float32)                      # (tb, H)

    logit_sum = None     # sum_h x_h                 (tb, c)
    wlogit_sum = None    # sum_h w_h * x_h           (tb, c)   weighted path only
    lse_acc = None       # sum_h [w_h *] lse_h       (tb, 1)
    dist_sum = None      # sum_h softmax(x_h / T)    (tb, c)
    distsq_sum = None    # sum_h dist_h^2            (tb, c)

    # Single pass over head data: every head tile is loaded & upcast exactly once.
    for h in range(num_heads):
        x = head_refs[h][...].astype(jnp.float32)                 # (tb, c)

        if need_logit_sum:
            logit_sum = x if h == 0 else logit_sum + x

        m = jnp.max(x, axis=1, keepdims=True)                     # (tb, 1)  XLU
        e = jnp.exp(x - m)                                        # (tb, c)  EUP
        s = row_sum(e)                                            # (tb, 1)
        lse = jnp.log(s) + m                                      # (tb, 1)

        if has_weight:
            w_h = wt[:, h:h + 1]                                  # (tb, 1)
            lse_acc = w_h * lse if h == 0 else lse_acc + w_h * lse
            wlogit_sum = w_h * x if h == 0 else wlogit_sum + w_h * x
        else:
            lse_acc = lse if h == 0 else lse_acc + lse

        if use_div:
            if temp == 1.0:
                ed, sd = e, s             # fused: reuse the CE exp/max pass
            else:
                ed = jnp.exp((x - m) * inv_temp)
                sd = row_sum(ed)
            dist = ed * pl.reciprocal(sd, approx=True)            # (tb, c)
            dist_sum = dist if h == 0 else dist_sum + dist
            dsq = dist * dist
            distsq_sum = dsq if h == 0 else distsq_sum + dsq

    # Cross-entropy: sum_h [w_h *] (lse_h - x_h[target]); the target logit is
    # selected once from the (weighted) head-sum logits instead of per head.
    if has_weight:
        tgt_logit = row_sum(jnp.where(tgt_mask, wlogit_sum, 0.0))
    else:
        tgt_logit = row_sum(jnp.where(tgt_mask, logit_sum, 0.0))
    ce_total = jnp.sum(lse_acc - tgt_logit)                       # small reduce

    contrib = ce_scale * ce_total

    if use_div:
        # mean_dist = softmax(mean_logits / T); exact division (enters the loss
        # quadratically), approx recip kept for the per-head dists above.
        z = logit_sum * (inv_temp / num_heads)
        z = z - jnp.max(z, axis=1, keepdims=True)
        ez = jnp.exp(z)
        mean_dist = ez / row_sum(ez)                              # (tb, c)
        # sum_h sum (dist_h - mean)^2 expanded; ONE full reduction per tile.
        div_total = jnp.sum(distsq_sum
                            - 2.0 * dist_sum * mean_dist
                            + float(num_heads) * (mean_dist * mean_dist))
        contrib = contrib + div_scale * div_total

    out_ref[...] += contrib


def _tpu_caps():
    """(physical VMEM bytes, TensorCores per chip) with safe fallbacks."""
    vmem_bytes = 64 * 1024 * 1024   # v7x-safe default
    cores = 2                       # assume dual-TC possible (harmless if single-TC)
    try:
        info = pltpu.get_tpu_info()
        vmem_bytes = int(getattr(info, "vmem_capacity_bytes", vmem_bytes))
        for attr in ("num_cores", "tensorcores_per_chip", "num_tensorcores",
                     "cores_per_chip"):
            v = getattr(info, attr, None)
            if v:
                cores = int(v)
                break
    except Exception:
        pass
    return vmem_bytes, cores


def _vmem_budget(phys_vmem_bytes):
    """(tile budget bytes, vmem_limit_bytes) — generation aware."""
    if phys_vmem_bytes >= 100 * 1024 * 1024:          # v5e / v6e: 128 MiB physical
        return 64 * 1024 * 1024, 96 * 1024 * 1024
    return 24 * 1024 * 1024, 32 * 1024 * 1024         # v7x: 64 MiB physical


def _batch_tiling(B, H, C, itemsize, budget_bytes, num_cores):
    """Pick (TB, P): batch-tile rows and parallel partitions."""
    if B % 8 != 0 or B <= 8:
        return B, 1
    # Dual-TC split only when the chip has 2 TensorCores AND B splits cleanly.
    # TODO(synk): pad B to a multiple of 16 (masking pad rows) so the v7x dual-TC
    #             split still engages when B % 16 != 0.
    P = 2 if (num_cores >= 2 and B % 16 == 0) else 1
    per = B // P
    # Double-buffered native-dtype head inputs + ~8 live f32 (TB, C) temporaries.
    per_row_bytes = 2 * H * C * itemsize + 8 * C * 4
    cap = max(8, (budget_bytes // per_row_bytes) // 8 * 8)
    if per <= cap:
        return per, P
    tb = cap
    while tb >= 8:
        if per % tb == 0:
            return tb, P
        tb -= 8
    return per, P  # no clean divisor: fall back to one tile per partition


def mh_loss(all_logits, target, weight=None, *,
            diversity_weight=-0.2, diversity_temperature=1.0,
            diversity_loss_type='l2'):
    """JAX/Pallas equivalent of MHLoss.forward (diversity_loss_type='l2')."""
    if diversity_loss_type != 'l2':
        raise NotImplementedError("only diversity_loss_type='l2' is implemented")

    all_logits = list(all_logits)
    H = len(all_logits)
    B, C = all_logits[0].shape
    has_weight = weight is not None

    tgt = target.astype(jnp.int32).reshape(B, 1)

    phys_vmem, num_cores = _tpu_caps()
    budget, vmem_limit = _vmem_budget(phys_vmem)
    TB, P = _batch_tiling(B, H, C, jnp.dtype(all_logits[0].dtype).itemsize,
                          budget, num_cores)
    T = B // (P * TB)  # batch tiles per parallel partition

    div_scale = float(diversity_weight) / float(B * C)
    ce_scale = (1.0 / B) if has_weight else (1.0 / (H * B))

    kernel = functools.partial(
        _mh_loss_kernel,
        num_heads=H, has_weight=has_weight,
        temp=float(diversity_temperature),
        div_scale=div_scale, ce_scale=ce_scale)

    head_map = lambda p, t: (p * T + t, 0)
    in_specs = [pl.BlockSpec((TB, C), head_map) for _ in range(H)]   # native dtype
    in_specs.append(pl.BlockSpec((TB, 1), head_map))                 # int32 targets
    inputs = list(all_logits) + [tgt]
    if has_weight:
        in_specs.append(pl.BlockSpec((TB, H), head_map))             # (B, H) weights
        inputs.append(weight)

    partials = pl.pallas_call(
        kernel,
        out_shape=jax.ShapeDtypeStruct((P, 1, 1), jnp.float32),
        grid_spec=pltpu.PrefetchScalarGridSpec(
            num_scalar_prefetch=0,
            grid=(P, T),
            in_specs=in_specs,
            out_specs=pl.BlockSpec((1, 1, 1), lambda p, t: (p, 0, 0)),
        ),
        compiler_params=pltpu.CompilerParams(
            dimension_semantics=("parallel", "arbitrary"),
            vmem_limit_bytes=vmem_limit),
    )(*inputs)
    # Per-core partial sums are combined outside the kernel.
    return jnp.sum(partials)


def mh_loss_ref(all_logits, target, weight=None, *,
                diversity_weight=-0.2, diversity_temperature=1.0):
    """Pure-JAX reference mirroring the PyTorch forward (f32 math)."""
    H = len(all_logits)
    all_f32 = [l.astype(jnp.float32) for l in all_logits]
    pred = sum(all_f32) / H
    loss = 0.0
    if diversity_weight != 0:
        mean_dist = jax.nn.softmax(pred / diversity_temperature, axis=1)
        for li in all_f32:
            dist = jax.nn.softmax(li / diversity_temperature, axis=1)
            loss += diversity_weight * jnp.mean((dist - mean_dist) ** 2)
    for i, li in enumerate(all_f32):
        logp = jax.nn.log_softmax(li, axis=1)
        ce = -jnp.take_along_axis(logp, target[:, None], axis=1)[:, 0]
        if weight is not None:
            loss += jnp.mean(weight[:, i].astype(jnp.float32) * ce)
        else:
            loss += jnp.mean(ce) / H
    return loss


if __name__ == "__main__":
    key = jax.random.PRNGKey(0)

    # Case 1: unweighted path (PyTorch default), single batch tile, f32.
    H, B, C = 4, 8, 32
    k_logits, k_tgt, k2 = jax.random.split(key, 3)
    all_logits = [
        jax.random.normal(jax.random.fold_in(k_logits, h), (B, C), dtype=jnp.float32)
        for h in range(H)
    ]
    target = jax.random.randint(k_tgt, (B,), 0, C, dtype=jnp.int32)
    out = jax.block_until_ready(mh_loss(all_logits, target))
    ref = mh_loss_ref(all_logits, target)
    assert jnp.allclose(out, ref, rtol=1e-3, atol=1e-3), (out, ref)

    # Case 2: weighted path, possible 2-way parallel split, bf16 logits DMA'd in
    # native dtype and upcast inside the kernel.
    H2, B2, C2 = 3, 32, 128
    k_l2, k_t2, k_w2, k3 = jax.random.split(k2, 4)
    logits2 = [
        jax.random.normal(jax.random.fold_in(k_l2, h), (B2, C2),
                          dtype=jnp.float32).astype(jnp.bfloat16)
        for h in range(H2)
    ]
    target2 = jax.random.randint(k_t2, (B2,), 0, C2, dtype=jnp.int32)
    weight2 = jax.random.uniform(k_w2, (B2, H2), dtype=jnp.float32)
    out2 = jax.block_until_ready(mh_loss(logits2, target2, weight2))
    ref2 = mh_loss_ref(logits2, target2, weight2)
    assert jnp.allclose(out2, ref2, rtol=2e-3, atol=2e-3), (out2, ref2)

    # Case 3: temperature != 1 and C >= 512 (exercises the MXU row-sum path).
    H3, B3, C3 = 2, 16, 512
    k_l3, k_t3 = jax.random.split(k3, 2)
    logits3 = [
        jax.random.normal(jax.random.fold_in(k_l3, h), (B3, C3), dtype=jnp.float32)
        for h in range(H3)
    ]
    target3 = jax.random.randint(k_t3, (B3,), 0, C3, dtype=jnp.int32)
    out3 = jax.block_until_ready(mh_loss(logits3, target3, diversity_temperature=2.0))
    ref3 = mh_loss_ref(logits3, target3, diversity_temperature=2.0)
    assert jnp.allclose(out3, ref3, rtol=1e-3, atol=1e-3), (out3, ref3)

    print("KERNEL_OK")
</pallas_src>

<mosaic_0001>
module attributes {stable_mosaic.version = 11 : i64} {
  func.func @_mh_loss_kernel(%arg0: i32, %arg1: i32, %arg2: memref<8x32xf32, #tpu.memory_space<vmem>>, %arg3: memref<8x32xf32, #tpu.memory_space<vmem>>, %arg4: memref<8x32xf32, #tpu.memory_space<vmem>>, %arg5: memref<8x32xf32, #tpu.memory_space<vmem>>, %arg6: memref<8x1xi32, #tpu.memory_space<vmem>>, %arg7: memref<1x1x1xf32, #tpu.memory_space<vmem>>) attributes {dimension_semantics = [#tpu.dimension_semantics<parallel>, #tpu.dimension_semantics<arbitrary>], iteration_bounds = array<i64: 1, 1>, scalar_prefetch = 0 : i64, scratch_operands = 0 : i64, tpu.core_type = #tpu.core_type<tc>, window_params = [{transform_indices = @transform_0, window_bounds = array<i64: 8, 32>}, {transform_indices = @transform_1, window_bounds = array<i64: 8, 32>}, {transform_indices = @transform_2, window_bounds = array<i64: 8, 32>}, {transform_indices = @transform_3, window_bounds = array<i64: 8, 32>}, {transform_indices = @transform_4, window_bounds = array<i64: 8, 1>}, {transform_indices = @transform_5, window_bounds = array<i64: 1, 1, 1>}]} {
    %c0_i32 = arith.constant 0 : i32
    %0 = arith.cmpi eq, %arg1, %c0_i32 : i32
    %1 = arith.extui %0 : i1 to i32
    %c0_i32_0 = arith.constant 0 : i32
    %2 = arith.cmpi ne, %1, %c0_i32_0 : i32
    scf.if %2 {
      %cst_34 = arith.constant 0.000000e+00 : f32
      %114 = vector.broadcast %cst_34 : f32 to vector<1x1x1xf32>
      %c0_35 = arith.constant 0 : index
      %c0_36 = arith.constant 0 : index
      %c0_37 = arith.constant 0 : index
      %115 = vector.load %arg7[%c0_35, %c0_36, %c0_37] : memref<1x1x1xf32, #tpu.memory_space<vmem>>, vector<1x1x1xf32>
      tpu.vector_store %arg7[%c0_35, %c0_36, %c0_37], %114 {strides = array<i32>} : memref<1x1x1xf32, #tpu.memory_space<vmem>>, vector<1x1x1xf32>,
    } else {
    }
    %c0 = arith.constant 0 : index
    %c0_1 = arith.constant 0 : index
    %3 = vector.load %arg6[%c0, %c0_1] : memref<8x1xi32, #tpu.memory_space<vmem>>, vector<8x1xi32>
    %4 = tpu.iota {dimensions = array<i32: 1>} : vector<8x32xi32>
    %5 = vector.broadcast %3 : vector<8x1xi32> to vector<8x32xi32>
    %6 = arith.cmpi eq, %4, %5 : vector<8x32xi32>
    %c0_2 = arith.constant 0 : index
    %c0_3 = arith.constant 0 : index
    %7 = vector.load %arg2[%c0_2, %c0_3] : memref<8x32xf32, #tpu.memory_space<vmem>>, vector<8x32xf32>
    %cst = arith.constant dense<0xFF800000> : vector<8xf32>
    %8 = vector.multi_reduction <maximumf>, %7, %cst [1] : vector<8x32xf32> to vector<8xf32>
    %9 = vector.shape_cast %8 : vector<8xf32> to vector<8x1xf32>
    %10 = vector.broadcast %9 : vector<8x1xf32> to vector<8x32xf32>
    %11 = arith.subf %7, %10 : vector<8x32xf32>
    %12 = math.exp %11 : vector<8x32xf32>
    %cst_4 = arith.constant dense<0.000000e+00> : vector<8xf32>
    %13 = vector.multi_reduction <add>, %12, %cst_4 [1] : vector<8x32xf32> to vector<8xf32>
    %14 = vector.shape_cast %13 : vector<8xf32> to vector<8x1xf32>
    %15 = math.log %14 : vector<8x1xf32>
    %16 = arith.addf %15, %9 : vector<8x1xf32>
    %17 = tpu.reciprocal %14 {approx = true} : vector<8x1xf32> -> vector<8x1xf32>
    %18 = vector.broadcast %17 : vector<8x1xf32> to vector<8x32xf32>
    %19 = arith.mulf %12, %18 : vector<8x32xf32>
    %20 = arith.mulf %19, %19 : vector<8x32xf32>
    %c0_5 = arith.constant 0 : index
    %c0_6 = arith.constant 0 : index
    %21 = vector.load %arg3[%c0_5, %c0_6] : memref<8x32xf32, #tpu.memory_space<vmem>>, vector<8x32xf32>
    %22 = arith.addf %7, %21 : vector<8x32xf32>
    %cst_7 = arith.constant dense<0xFF800000> : vector<8xf32>
    %23 = vector.multi_reduction <maximumf>, %21, %cst_7 [1] : vector<8x32xf32> to vector<8xf32>
    %24 = vector.shape_cast %23 : vector<8xf32> to vector<8x1xf32>
    %25 = vector.broadcast %24 : vector<8x1xf32> to vector<8x32xf32>
    %26 = arith.subf %21, %25 : vector<8x32xf32>
    %27 = math.exp %26 : vector<8x32xf32>
    %cst_8 = arith.constant dense<0.000000e+00> : vector<8xf32>
    %28 = vector.multi_reduction <add>, %27, %cst_8 [1] : vector<8x32xf32> to vector<8xf32>
    %29 = vector.shape_cast %28 : vector<8xf32> to vector<8x1xf32>
    %30 = math.log %29 : vector<8x1xf32>
    %31 = arith.addf %30, %24 : vector<8x1xf32>
    %32 = arith.addf %16, %31 : vector<8x1xf32>
    %33 = tpu.reciprocal %29 {approx = true} : vector<8x1xf32> -> vector<8x1xf32>
    %34 = vector.broadcast %33 : vector<8x1xf32> to vector<8x32xf32>
    %35 = arith.mulf %27, %34 : vector<8x32xf32>
    %36 = arith.addf %19, %35 : vector<8x32xf32>
    %37 = arith.mulf %35, %35 : vector<8x32xf32>
    %38 = arith.addf %20, %37 : vector<8x32xf32>
    %c0_9 = arith.constant 0 : index
    %c0_10 = arith.constant 0 : index
    %39 = vector.load %arg4[%c0_9, %c0_10] : memref<8x32xf32, #tpu.memory_space<vmem>>, vector<8x32xf32>
    %40 = arith.addf %22, %39 : vector<8x32xf32>
    %cst_11 = arith.constant dense<0xFF800000> : vector<8xf32>
    %41 = vector.multi_reduction <maximumf>, %39, %cst_11 [1] : vector<8x32xf32> to vector<8xf32>
    %42 = vector.shape_cast %41 : vector<8xf32> to vector<8x1xf32>
    %43 = vector.broadcast %42 : vector<8x1xf32> to vector<8x32xf32>
    %44 = arith.subf %39, %43 : vector<8x32xf32>
    %45 = math.exp %44 : vector<8x32xf32>
    %cst_12 = arith.constant dense<0.000000e+00> : vector<8xf32>
    %46 = vector.multi_reduction <add>, %45, %cst_12 [1] : vector<8x32xf32> to vector<8xf32>
    %47 = vector.shape_cast %46 : vector<8xf32> to vector<8x1xf32>
    %48 = math.log %47 : vector<8x1xf32>
    %49 = arith.addf %48, %42 : vector<8x1xf32>
    %50 = arith.addf %32, %49 : vector<8x1xf32>
    %51 = tpu.reciprocal %47 {approx = true} : vector<8x1xf32> -> vector<8x1xf32>
    %52 = vector.broadcast %51 : vector<8x1xf32> to vector<8x32xf32>
    %53 = arith.mulf %45, %52 : vector<8x32xf32>
    %54 = arith.addf %36, %53 : vector<8x32xf32>
    %55 = arith.mulf %53, %53 : vector<8x32xf32>
    %56 = arith.addf %38, %55 : vector<8x32xf32>
    %c0_13 = arith.constant 0 : index
    %c0_14 = arith.constant 0 : index
    %57 = vector.load %arg5[%c0_13, %c0_14] : memref<8x32xf32, #tpu.memory_space<vmem>>, vector<8x32xf32>
    %58 = arith.addf %40, %57 : vector<8x32xf32>
    %cst_15 = arith.constant dense<0xFF800000> : vector<8xf32>
    %59 = vector.multi_reduction <maximumf>, %57, %cst_15 [1] : vector<8x32xf32> to vector<8xf32>
    %60 = vector.shape_cast %59 : vector<8xf32> to vector<8x1xf32>
    %61 = vector.broadcast %60 : vector<8x1xf32> to vector<8x32xf32>
    %62 = arith.subf %57, %61 : vector<8x32xf32>
    %63 = math.exp %62 : vector<8x32xf32>
    %cst_16 = arith.constant dense<0.000000e+00> : vector<8xf32>
    %64 = vector.multi_reduction <add>, %63, %cst_16 [1] : vector<8x32xf32> to vector<8xf32>
    %65 = vector.shape_cast %64 : vector<8xf32> to vector<8x1xf32>
    %66 = math.log %65 : vector<8x1xf32>
    %67 = arith.addf %66, %60 : vector<8x1xf32>
    %68 = arith.addf %50, %67 : vector<8x1xf32>
    %69 = tpu.reciprocal %65 {approx = true} : vector<8x1xf32> -> vector<8x1xf32>
    %70 = vector.broadcast %69 : vector<8x1xf32> to vector<8x32xf32>
    %71 = arith.mulf %63, %70 : vector<8x32xf32>
    %72 = arith.addf %54, %71 : vector<8x32xf32>
    %73 = arith.mulf %71, %71 : vector<8x32xf32>
    %74 = arith.addf %56, %73 : vector<8x32xf32>
    %cst_17 = arith.constant 0.000000e+00 : f32
    %75 = vector.broadcast %cst_17 : f32 to vector<8x32xf32>
    %76 = arith.select %6, %58, %75 : vector<8x32xi1>, vector<8x32xf32>
    %cst_18 = arith.constant dense<0.000000e+00> : vector<8xf32>
    %77 = vector.multi_reduction <add>, %76, %cst_18 [1] : vector<8x32xf32> to vector<8xf32>
    %78 = vector.shape_cast %77 : vector<8xf32> to vector<8x1xf32>
    %79 = arith.subf %68, %78 : vector<8x1xf32>
    %80 = vector.shape_cast %79 : vector<8x1xf32> to vector<1x8x1xf32>
    %cst_19 = arith.constant dense<0.000000e+00> : vector<1xf32>
    %81 = vector.multi_reduction <add>, %80, %cst_19 [1, 2] : vector<1x8x1xf32> to vector<1xf32>
    %82 = vector.shape_cast %81 : vector<1xf32> to vector<1x1x1xf32>
    %83 = vector.extract %82[0, 0, 0] : f32 from vector<1x1x1xf32>
    %cst_20 = arith.constant 3.125000e-02 : f32
    %84 = arith.mulf %cst_20, %83 : f32
    %cst_21 = arith.constant 2.500000e-01 : f32
    %85 = vector.broadcast %cst_21 : f32 to vector<8x32xf32>
    %86 = arith.mulf %58, %85 : vector<8x32xf32>
    %cst_22 = arith.constant dense<0xFF800000> : vector<8xf32>
    %87 = vector.multi_reduction <maximumf>, %86, %cst_22 [1] : vector<8x32xf32> to vector<8xf32>
    %88 = vector.shape_cast %87 : vector<8xf32> to vector<8x1xf32>
    %89 = vector.broadcast %88 : vector<8x1xf32> to vector<8x32xf32>
    %90 = arith.subf %86, %89 : vector<8x32xf32>
    %91 = math.exp %90 : vector<8x32xf32>
    %cst_23 = arith.constant dense<0.000000e+00> : vector<8xf32>
    %92 = vector.multi_reduction <add>, %91, %cst_23 [1] : vector<8x32xf32> to vector<8xf32>
    %93 = vector.shape_cast %92 : vector<8xf32> to vector<8x1xf32>
    %94 = vector.broadcast %93 : vector<8x1xf32> to vector<8x32xf32>
    %95 = arith.divf %91, %94 : vector<8x32xf32>
    %cst_24 = arith.constant 2.000000e+00 : f32
    %96 = vector.broadcast %cst_24 : f32 to vector<8x32xf32>
    %97 = arith.mulf %96, %72 : vector<8x32xf32>
    %98 = arith.mulf %97, %95 : vector<8x32xf32>
    %99 = arith.subf %74, %98 : vector<8x32xf32>
    %100 = arith.mulf %95, %95 : vector<8x32xf32>
    %cst_25 = arith.constant 4.000000e+00 : f32
    %101 = vector.broadcast %cst_25 : f32 to vector<8x32xf32>
    %102 = arith.mulf %101, %100 : vector<8x32xf32>
    %103 = arith.addf %99, %102 : vector<8x32xf32>
    %104 = vector.shape_cast %103 : vector<8x32xf32> to vector<1x8x32xf32>
    %cst_26 = arith.constant dense<0.000000e+00> : vector<1xf32>
    %105 = vector.multi_reduction <add>, %104, %cst_26 [1, 2] : vector<1x8x32xf32> to vector<1xf32>
    %106 = vector.shape_cast %105 : vector<1xf32> to vector<1x1x1xf32>
    %107 = vector.extract %106[0, 0, 0] : f32 from vector<1x1x1xf32>
    %cst_27 = arith.constant -7.812500e-04 : f32
    %108 = arith.mulf %cst_27, %107 : f32
    %109 = arith.addf %84, %108 : f32
    %c0_28 = arith.constant 0 : index
    %c0_29 = arith.constant 0 : index
    %c0_30 = arith.constant 0 : index
    %110 = vector.load %arg7[%c0_28, %c0_29, %c0_30] : memref<1x1x1xf32, #tpu.memory_space<vmem>>, vector<1x1x1xf32>
    %111 = vector.broadcast %109 : f32 to vector<1x1x1xf32>
    %112 = arith.addf %110, %111 : vector<1x1x1xf32>
    %c0_31 = arith.constant 0 : index
    %c0_32 = arith.constant 0 : index
    %c0_33 = arith.constant 0 : index
    %113 = vector.load %arg7[%c0_31, %c0_32, %c0_33] : memref<1x1x1xf32, #tpu.memory_space<vmem>>, vector<1x1x1xf32>
    tpu.vector_store %arg7[%c0_31, %c0_32, %c0_33], %112 {strides = array<i32>} : memref<1x1x1xf32, #tpu.memory_space<vmem>>, vector<1x1x1xf32>,
    return
  }
  func.func @transform_0(%arg0: i32, %arg1: i32) -> (i32, i32) {
    %c1_i32 = arith.constant 1 : i32
    %0 = arith.muli %arg0, %c1_i32 : i32
    %1 = arith.addi %0, %arg1 : i32
    %c0_i32 = arith.constant 0 : i32
    %c0_i32_0 = arith.constant 0 : i32
    return %1, %c0_i32 : i32, i32
  }
  func.func @transform_1(%arg0: i32, %arg1: i32) -> (i32, i32) {
    %c1_i32 = arith.constant 1 : i32
    %0 = arith.muli %arg0, %c1_i32 : i32
    %1 = arith.addi %0, %arg1 : i32
    %c0_i32 = arith.constant 0 : i32
    %c0_i32_0 = arith.constant 0 : i32
    return %1, %c0_i32 : i32, i32
  }
  func.func @transform_2(%arg0: i32, %arg1: i32) -> (i32, i32) {
    %c1_i32 = arith.constant 1 : i32
    %0 = arith.muli %arg0, %c1_i32 : i32
    %1 = arith.addi %0, %arg1 : i32
    %c0_i32 = arith.constant 0 : i32
    %c0_i32_0 = arith.constant 0 : i32
    return %1, %c0_i32 : i32, i32
  }
  func.func @transform_3(%arg0: i32, %arg1: i32) -> (i32, i32) {
    %c1_i32 = arith.constant 1 : i32
    %0 = arith.muli %arg0, %c1_i32 : i32
    %1 = arith.addi %0, %arg1 : i32
    %c0_i32 = arith.constant 0 : i32
    %c0_i32_0 = arith.constant 0 : i32
    return %1, %c0_i32 : i32, i32
  }
  func.func @transform_4(%arg0: i32, %arg1: i32) -> (i32, i32) {
    %c1_i32 = arith.constant 1 : i32
    %0 = arith.muli %arg0, %c1_i32 : i32
    %1 = arith.addi %0, %arg1 : i32
    %c0_i32 = arith.constant 0 : i32
    %c0_i32_0 = arith.constant 0 : i32
    return %1, %c0_i32 : i32, i32
  }
  func.func @transform_5(%arg0: i32, %arg1: i32) -> (i32, i32, i32) {
    %c0_i32 = arith.constant 0 : i32
    %c0_i32_0 = arith.constant 0 : i32
    %c0_i32_1 = arith.constant 0 : i32
    return %arg0, %c0_i32, %c0_i32_0 : i32, i32, i32
  }
}

</mosaic_0001>

<llo_original>
// kernel: tpu_custom_call.1
$region0: #{tpu_custom_call.1}
  #allocation0 [shape = 'u32[]', space=smem, size = 0x4, offset = 0x4, fixed_abs, tag = 'smem constant byte address 0x4 - core index']
  #allocation1 [shape = 'u32[144,128]{1,0:T(1,128)}', space=vmem, size = 0x12000, scoped, tag = 'internal scratch']
  %s0 = inlined_call_operand.vmem [shape: f32[8,32], index: 0, kind: input, shape index: {}]
  %s1 = inlined_call_operand.hbm [shape: f32[8,32], index: 1, kind: input, shape index: {}]
  %s2 = inlined_call_operand.hbm [shape: f32[8,32], index: 2, kind: input, shape index: {}]
  %s3 = inlined_call_operand.hbm [shape: f32[8,32], index: 3, kind: input, shape index: {}]
  %s4 = inlined_call_operand.vmem [shape: s32[8,1], index: 4, kind: input, shape index: {}]
  %s5 = inlined_call_operand.hbm [shape: f32[1,1,1], index: 5, kind: output, shape index: {}]
  %s6 = sld [smem:[#allocation0]]
  $region46: #{tpu_custom_call.1} parent=0
    _
  %s8 = ssub.s32 1, %s6
  %s9 = scalar_select 0, %s8, %s6
  $region1: #{tpu_custom_call.1} parent=0
    #allocation2 [shape = 'u8[4096]{0}', space=vmem, size = 0x1000, scoped, tag = 'input window, operand 1, single buffered']
    #allocation3 [shape = 's32[1]{0}', space=sflag, size = 0x4, scoped, tag = 'scoped memory for tpu_custom_call.1']
    #allocation4 [shape = 's32[1]{0}', space=sflag, size = 0x4, scoped, tag = 'scoped memory for tpu_custom_call.1']
    #allocation5 [shape = 'u8[4096]{0}', space=vmem, size = 0x1000, scoped, tag = 'input window, operand 2, single buffered']
    #allocation6 [shape = 's32[1]{0}', space=sflag, size = 0x4, scoped, tag = 'scoped memory for tpu_custom_call.1']
    #allocation7 [shape = 'u8[4096]{0}', space=vmem, size = 0x1000, scoped, tag = 'input window, operand 3, single buffered']
    #allocation8 [shape = 'u8[512]{0}', space=vmem, size = 0x400, scoped, tag = 'output window, operand 0, single buffered']
    %10 = vsyncpa [#allocation3], 0
    %11 = vsyncpa [#allocation6], 0
    %12 = vsyncpa [#allocation4], 0
    // Predicated region
    $region2: #{tpu_custom_call.1} parent=1 // pred_check
      _
    $region3: #{tpu_custom_call.1} parent=1 // pred_check_branch
      %14 = sbr.rel (0) target = $region5
    $region4: #{tpu_custom_call.1} parent=1 // pred_region
      %s15 = sadd.s32 0, 0
      %p16 = scmp.lt.s32.totalorder %s15, 0
      %s17 = scalar_select %p16, %s15, 0
      %s18 = smul.addr %s17, 8
      %s19 = scalar_lea.vmem %s0, %s18
      %s20 = sadd.s32 0, 0
    $region5: #{tpu_custom_call.1} parent=1 // pred_fallthru
      _
    // Predicated region
    $region6: #{tpu_custom_call.1} parent=1 // pred_check
      _
    $region7: #{tpu_custom_call.1} parent=1 // pred_check_branch
      %22 = sbr.rel (0) target = $region9
    $region8: #{tpu_custom_call.1} parent=1 // pred_region
      %s23 = sadd.s32 0, 0
      %s25 = ssub.s32 128, 128
      %26 = vsyncadd [#allocation3], %s25
      %s27 = smul.addr %s23, 128
      %s28 = scalar_lea.hbm %s1, %s27
      %s30 = sshll.u32 [#allocation2], 4
      %s31 = int_to_ptr.vmem [resolvable:$true] %s30
      %33 = dma.hbm_to_vmem [thread:$0]  %s28, 128, %s31, [#allocation3]
    $region9: #{tpu_custom_call.1} parent=1 // pred_fallthru
      _
    // Predicated region
    $region10: #{tpu_custom_call.1} parent=1 // pred_check
      _
    $region11: #{tpu_custom_call.1} parent=1 // pred_check_branch
      %35 = sbr.rel (0) target = $region13
    $region12: #{tpu_custom_call.1} parent=1 // pred_region
      %s36 = sadd.s32 0, 0
      %s38 = ssub.s32 128, 128
      %39 = vsyncadd [#allocation6], %s38
      %s40 = smul.addr %s36, 128
      %s41 = scalar_lea.hbm %s2, %s40
      %s43 = sshll.u32 [#allocation5], 4
      %s44 = int_to_ptr.vmem [resolvable:$true] %s43
      %46 = dma.hbm_to_vmem [thread:$0]  %s41, 128, %s44, [#allocation6]
    $region13: #{tpu_custom_call.1} parent=1 // pred_fallthru
      _
    // Predicated region
    $region14: #{tpu_custom_call.1} parent=1 // pred_check
      _
    $region15: #{tpu_custom_call.1} parent=1 // pred_check_branch
      %48 = sbr.rel (0) target = $region17
    $region16: #{tpu_custom_call.1} parent=1 // pred_region
      %s49 = sadd.s32 0, 0
      %s51 = ssub.s32 128, 128
      %52 = vsyncadd [#allocation6], %s51
      %s53 = smul.addr %s49, 128
      %s54 = scalar_lea.hbm %s3, %s53
      %s56 = sshll.u32 [#allocation7], 4
      %s57 = int_to_ptr.vmem [resolvable:$true] %s56
      %59 = dma.hbm_to_vmem [thread:$0]  %s54, 128, %s57, [#allocation6]
    $region17: #{tpu_custom_call.1} parent=1 // pred_fallthru
      _
    // Predicated region
    $region18: #{tpu_custom_call.1} parent=1 // pred_check
      _
    $region19: #{tpu_custom_call.1} parent=1 // pred_check_branch
      %61 = sbr.rel (0) target = $region21
    $region20: #{tpu_custom_call.1} parent=1 // pred_region
      %s62 = sadd.s32 0, 0
      %p63 = scmp.lt.s32.totalorder %s62, 0
      %s64 = scalar_select %p63, %s62, 0
      %s65 = smul.addr %s64, 8
      %s66 = scalar_lea.vmem %s4, %s65
      %s67 = sadd.s32 0, 0
    $region21: #{tpu_custom_call.1} parent=1 // pred_fallthru
      _
    // Predicated region
    $region22: #{tpu_custom_call.1} parent=1 // pred_check
      _
    $region23: #{tpu_custom_call.1} parent=1 // pred_check_branch
      %69 = sbr.rel (0) target = $region25
    $region24: #{tpu_custom_call.1} parent=1 // pred_region
      %70 = dma.done [#allocation3], 128
    $region25: #{tpu_custom_call.1} parent=1 // pred_fallthru
      _
    // Predicated region
    $region26: #{tpu_custom_call.1} parent=1 // pred_check
      _
    $region27: #{tpu_custom_call.1} parent=1 // pred_check_branch
      %72 = sbr.rel (0) target = $region29
    $region28: #{tpu_custom_call.1} parent=1 // pred_region
      %73 = dma.done [#allocation6], 128
    $region29: #{tpu_custom_call.1} parent=1 // pred_fallthru
      _
    // Predicated region
    $region30: #{tpu_custom_call.1} parent=1 // pred_check
      _
    $region31: #{tpu_custom_call.1} parent=1 // pred_check_branch
      %75 = sbr.rel (0) target = $region33
    $region32: #{tpu_custom_call.1} parent=1 // pred_region
      %76 = dma.done [#allocation6], 128
    $region33: #{tpu_custom_call.1} parent=1 // pred_fallthru
      _
    %s77 = sadd.s32 0, 0
    %p78 = scmp.lt.s32.totalorder %s77, 0
    %s79 = scalar_select %p78, %s77, 0
    %s80 = smul.addr %s79, 8
    %s81 = scalar_lea.vmem %s0, %s80
    %s82 = sadd.s32 0, 0
    %p83 = scmp.lt.s32.totalorder %s82, 0
    %s84 = scalar_select %p83, %s82, 0
    %s85 = smul.addr %s84, 8
    %s86 = scalar_lea.vmem %s4, %s85
    %s87 = sadd.s32 0, 0
    %p88 = scmp.lt.s32.totalorder %s87, 0
    %s89 = scalar_select %p88, %s87, 0
    %s90 = smul.addr %s89, 8
    %s91 = scalar_lea.vmem %s0, %s90
    %s92 = sadd.s32 0, 0
    %s93 = sadd.s32 0, 0
    %s94 = sadd.s32 0, 0
    %s95 = sadd.s32 0, 0
    %s96 = sadd.s32 0, 0
    %p97 = scmp.lt.s32.totalorder %s96, 0
    %s98 = scalar_select %p97, %s96, 0
    %s99 = smul.addr %s98, 8
    %s100 = scalar_lea.vmem %s4, %s99
    %s101 = sadd.s32 0, 0
    %p102 = scmp.eq.s32.totalorder 0, 0
    // Predicated region
    $region34: #{tpu_custom_call.1} parent=1 // pred_check
      %p103 = pneg %p102
    $region35: #{tpu_custom_call.1} parent=1 // pred_check_branch
      %105 = sbr.rel (%p103) target = $region37
    $region36: #{tpu_custom_call.1} parent=1 // pred_region
      %vm106 = vcmask 0
      %107 = vst.msk [vmem:[#allocation8] sm:$0x1] %vm106, 0.0
    $region37: #{tpu_custom_call.1} parent=1 // pred_fallthru
      _
    %v108 = vld [vmem:[%s100] sm:$0xff]
    %v109 = vlaneseq
    %v110 = vand.u32 %v109, 127
    %111 = vset.pattern.permute.xlu0 0
    %112 = vperm.xlu0 %111, %v108
    %v113 = vpop.permute.xlu0 %112
    %vm114 = vcmp.eq.s32.totalorder %v110, %v113
    %v115 = vld [vmem:[%s91] sm:$0xff]
    %vm116 = vcmask 261120
    %v117 = vsel %vm116, %v115, -inf
    %118 = vmax.xlane.f32.xlu0 %v117
    %v119 = vpop.xlane.xlu0 %118
    %v120 = vsub.f32 %v115, %v119
    %v121 = vmul.f32 %v120, 1.442695
    %v122 = vpow.pop %v121
    %v123 = vsel %vm116, %v122, 0.0
    %124 = vadd.xlane.f32.xlu0 %v123
    %v125 = vpop.xlane.xlu0 %124
    %v126 = vlog2.pop %v125
    %v127 = vmul.f32 %v126, 0.6931472
    %v128 = vadd.f32 %v127, %v119
    %v129 = vrcp.pop %v125
    %v130 = vmul.f32 %v122, %v129
    %v131 = vmul.f32 %v130, %v130
    %v132 = vld [vmem:[#allocation2] sm:$0xff]
    %v133 = vadd.f32 %v115, %v132
    %v134 = vsel %vm116, %v132, -inf
    %135 = vmax.xlane.f32.xlu0 %v134
    %v136 = vpop.xlane.xlu0 %135
    %v137 = vsub.f32 %v132, %v136
    %v138 = vmul.f32 %v137, 1.442695
    %v139 = vpow.pop %v138
    %v140 = vsel %vm116, %v139, 0.0
    %141 = vadd.xlane.f32.xlu0 %v140
    %v142 = vpop.xlane.xlu0 %141
    %v143 = vlog2.pop %v142
    %v144 = vmul.f32 %v143, 0.6931472
    %v145 = vadd.f32 %v144, %v136
    %v146 = vadd.f32 %v128, %v145
    %v147 = vrcp.pop %v142
    %v148 = vmul.f32 %v139, %v147
    %v149 = vadd.f32 %v130, %v148
    %v150 = vmul.f32 %v148, %v148
    %v151 = vadd.f32 %v131, %v150
    %v152 = vld [vmem:[#allocation5] sm:$0xff]
    %v153 = vadd.f32 %v133, %v152
    %v154 = vsel %vm116, %v152, -inf
    %155 = vmax.xlane.f32.xlu0 %v154
    %v156 = vpop.xlane.xlu0 %155
    %v157 = vsub.f32 %v152, %v156
    %v158 = vmul.f32 %v157, 1.442695
    %v159 = vpow.pop %v158
    %v160 = vsel %vm116, %v159, 0.0
    %161 = vadd.xlane.f32.xlu0 %v160
    %v162 = vpop.xlane.xlu0 %161
    %v163 = vlog2.pop %v162
    %v164 = vmul.f32 %v163, 0.6931472
    %v165 = vadd.f32 %v164, %v156
    %v166 = vadd.f32 %v146, %v165
    %v167 = vrcp.pop %v162
    %v168 = vmul.f32 %v159, %v167
    %v169 = vadd.f32 %v149, %v168
    %v170 = vmul.f32 %v168, %v168
    %v171 = vadd.f32 %v151, %v170
    %v172 = vld [vmem:[#allocation7] sm:$0xff]
    %v173 = vadd.f32 %v153, %v172
    %v174 = vsel %vm116, %v172, -inf
    %175 = vmax.xlane.f32.xlu0 %v174
    %v176 = vpop.xlane.xlu0 %175
    %v177 = vsub.f32 %v172, %v176
    %v178 = vmul.f32 %v177, 1.442695
    %v179 = vpow.pop %v178
    %v180 = vsel %vm116, %v179, 0.0
    %181 = vadd.xlane.f32.xlu0 %v180
    %v182 = vpop.xlane.xlu0 %181
    %v183 = vlog2.pop %v182
    %v184 = vmul.f32 %v183, 0.6931472
    %v185 = vadd.f32 %v184, %v176
    %v186 = vadd.f32 %v166, %v185
    %v187 = vrcp.pop %v182
    %v188 = vmul.f32 %v179, %v187
    %v189 = vadd.f32 %v169, %v188
    %v190 = vmul.f32 %v188, %v188
    %v191 = vadd.f32 %v171, %v190
    %v192 = vsel %vm114, %v173, 0.0
    %v193 = vsel %vm116, %v192, 0.0
    %194 = vadd.xlane.f32.xlu0 %v193
    %v195 = vpop.xlane.xlu0 %194
    %v196 = vsub.f32 %v186, %v195
    %vm197 = vcmask 7168
    %v198 = vsel %vm197, %v196, 0.0
    %199 = vadd.xlane.f32.xlu0 %v198
    %v200 = vpop.xlane.xlu0 %199
    %v201 = vrot.slane %v200, 4
    %v202 = vadd.f32 %v200, %v201
    %v203 = vrot.slane %v202, 2
    %v204 = vadd.f32 %v202, %v203
    %v205 = vrot.slane %v204, 1
    %v206 = vadd.f32 %v204, %v205
    %s207 = vtos %v206
    %s208 = smul.f32 %s207, 0.03125
    %v209 = vmul.f32 %v173, 0.25
    %v210 = vsel %vm116, %v209, -inf
    %211 = vmax.xlane.f32.xlu0 %v210
    %v212 = vpop.xlane.xlu0 %211
    %v213 = vsub.f32 %v209, %v212
    %v214 = vmul.f32 %v213, 1.442695
    %v215 = vpow.pop %v214
    %v216 = vsel %vm116, %v215, 0.0
    %217 = vadd.xlane.f32.xlu0 %v216
    %v218 = vpop.xlane.xlu0 %217
    %v219 = vrcp.pop %v218
    %v220 = vmul.f32 %v215, %v219
    %v221 = vmul.f32 %v189, 2.0
    %v222 = vmul.f32 %v221, %v220
    %v223 = vsub.f32 %v191, %v222
    %v224 = vmul.f32 %v220, %v220
    %v225 = vmul.f32 %v224, 4.0
    %v226 = vadd.f32 %v223, %v225
    %v227 = vsel %vm116, %v226, 0.0
    %228 = vadd.xlane.f32.xlu0 %v227
    %v229 = vpop.xlane.xlu0 %228
    %v230 = vrot.slane %v229, 4
    %v231 = vadd.f32 %v229, %v230
    %v232 = vrot.slane %v231, 2
    %v233 = vadd.f32 %v231, %v232
    %v234 = vrot.slane %v233, 1
    %v235 = vadd.f32 %v233, %v234
    %s236 = vtos %v235
    %s237 = smul.f32 %s236, -0.00078125
    %s238 = sadd.f32 %s208, %s237
    %v239 = vld [vmem:[#allocation8] sm:$0x1]
    %v240 = vstv %s238
    %v241 = vadd.f32 %v239, %v240
    %vm242 = vcmask 0
    %243 = vst.msk [vmem:[#allocation8] sm:$0x1] %vm242, %v241
    // Predicated region
    $region38: #{tpu_custom_call.1} parent=1 // pred_check
      _
    $region39: #{tpu_custom_call.1} parent=1 // pred_check_branch
      %245 = sbr.rel (0) target = $region41
    $region40: #{tpu_custom_call.1} parent=1 // pred_region
      %s247 = ssub.s32 16, 16
      %248 = vsyncadd [#allocation4], %s247
      %s250 = sshll.u32 [#allocation8], 4
      %s251 = int_to_ptr.vmem [resolvable:$true] %s250
      %253 = dma.vmem_to_hbm [thread:$0]  %s251, 16, %s5, [#allocation4]
    $region41: #{tpu_custom_call.1} parent=1 // pred_fallthru
      _
    // Predicated region
    $region42: #{tpu_custom_call.1} parent=1 // pred_check
      _
    $region43: #{tpu_custom_call.1} parent=1 // pred_check_branch
      %255 = sbr.rel (0) target = $region45
    $region44: #{tpu_custom_call.1} parent=1 // pred_region
      %256 = dma.done [#allocation4], 16
    $region45: #{tpu_custom_call.1} parent=1 // pred_fallthru
      _
    %257 = vsyncpa [#allocation3], 1
    %258 = vsyncpa [#allocation6], 1
    %259 = vsyncpa [#allocation4], 1

</llo_original>
